<compile_context>
chip_gen: v7x
topology: tpu7x:2x2x1
jax: 0.10.0
libtpu: 0.0.40
codegen_flags: <defaults>
</compile_context>

<pallas_src>
import functools

import jax
import jax.numpy as jnp
from jax.experimental import pallas as pl
from jax.experimental.pallas import tpu as pltpu

DIST_THRESHOLD = 0.001
DIST_COEFF = 10000.0
P_CENTER = (-0.001782, 1.005e-05, 0.0431621)
HALF_EXT = (0.204416 / 2 + DIST_THRESHOLD,
            0.0632517 / 2 + DIST_THRESHOLD,
            0.1381738 / 2 + DIST_THRESHOLD)
LO = tuple(c - h for c, h in zip(P_CENTER, HALF_EXT))
HI = tuple(c + h for c, h in zip(P_CENTER, HALF_EXT))

# Padding sentinel: stays far outside the AABB after any unit rotation + small translation.
# NOTE: assumes f32 points and a unit-quaternion convention (documented per review).
_PAD_SENTINEL = 1e6


def _collision_kernel(params_ref, pc_ref, out_ref, *, tb):
    # params_ref: SMEM [B_pad*16] scalar-prefetched table:
    #             per batch [R00..R22, tx, ty, tz, pad x4]
    # pc_ref:     VMEM [tb, 3, rows, 128]  sentinel-padded, sublane-packed points
    # out_ref:    SMEM [tb, 1]
    g = pl.program_id(0)
    for i in range(tb):                       # static unroll over sub-batches of this block
        b = g * tb + i
        base = b * 16
        r = [params_ref[base + k] for k in range(9)]
        tx = params_ref[base + 9]
        ty = params_ref[base + 10]
        tz = params_ref[base + 11]

        px = pc_ref[i, 0]                     # (rows, 128): full (8,128) vreg tiles
        py = pc_ref[i, 1]
        pz = pc_ref[i, 2]

        # rigid transform q = R_inv @ p - t   (hot path, pure VPU, sublane-packed)
        qx = r[0] * px + r[1] * py + r[2] * pz - tx
        qy = r[3] * px + r[4] * py + r[5] * pz - ty
        qz = r[6] * px + r[7] * py + r[8] * pz - tz

        inside = ((qx >= LO[0]) & (qx <= HI[0]) &
                  (qy >= LO[1]) & (qy <= HI[1]) &
                  (qz >= LO[2]) & (qz <= HI[2]))

        norms = jnp.sqrt(qx * qx + qy * qy + qz * qz)          # sqrt on EUP path
        masked = jnp.where(inside, norms, 0.0)                 # single vselect, no extra mul

        s = jnp.sum(masked)                                    # XLU lane+sublane reduce
        cnt = jnp.sum(inside.astype(jnp.float32))

        dist = jnp.where(cnt > 0.0, -s / jnp.maximum(cnt, 1.0), 1.0)
        out_ref[i, 0] = dist * DIST_COEFF


def _quat_inv_rotmat(quat):
    """Rotation matrix (row-major, [B,9]) of the inverse of `quat` ([w,x,y,z])."""
    q = quat / jnp.linalg.norm(quat, axis=-1, keepdims=True)
    w = q[:, 0]
    x = -q[:, 1]
    y = -q[:, 2]
    z = -q[:, 3]
    return jnp.stack([
        1 - 2 * (y * y + z * z), 2 * (x * y - w * z),     2 * (x * z + w * y),
        2 * (x * y + w * z),     1 - 2 * (x * x + z * z), 2 * (y * z - w * x),
        2 * (x * z - w * y),     2 * (y * z + w * x),     1 - 2 * (x * x + y * y),
    ], axis=-1).astype(jnp.float32)


@jax.jit
def collision_distance_evaluator(trans, quat, pc):
    """trans [B,3], quat [B,4] ([w,x,y,z]), pc [B,N,3] -> logit [B,1]."""
    B, N, _ = pc.shape

    tb = min(8, B)                                    # batches per grid step
    b_pad = ((B + tb - 1) // tb) * tb
    rows = max(8, 8 * ((N + 1023) // 1024))           # sublane rows, multiple of 8
    n_slot = rows * 128

    # Per-batch rotation/translation table (tiny glue JAX), flattened to 1-D for SMEM.
    r9 = _quat_inv_rotmat(quat)                                        # [B, 9]
    params = jnp.zeros((b_pad, 16), jnp.float32)
    params = params.at[:B, 0:9].set(r9).at[:B, 9:12].set(trans.astype(jnp.float32))
    params_flat = params.reshape(-1)                                   # [b_pad*16]

    # Sublane-packed point layout [B_pad, 3, rows, 128]; pads land outside the AABB.
    # TODO(synk): producer should emit this layout directly (or the transpose/pad should be
    # fused into the pallas_call) to avoid an extra HBM round trip on large point clouds;
    # for very large N on v7x, additionally chunk the point axis with s/cnt accumulators.
    pc_t = jnp.transpose(pc.astype(jnp.float32), (0, 2, 1))            # [B, 3, N]
    pc_t = jnp.pad(pc_t, ((0, b_pad - B), (0, 0), (0, n_slot - N)),
                   constant_values=_PAD_SENTINEL)
    pc_t = pc_t.reshape(b_pad, 3, rows, 128)

    kernel = functools.partial(_collision_kernel, tb=tb)
    out = pl.pallas_call(
        kernel,
        out_shape=jax.ShapeDtypeStruct((b_pad, 1), jnp.float32),
        grid_spec=pltpu.PrefetchScalarGridSpec(
            num_scalar_prefetch=1,
            grid=(b_pad // tb,),
            in_specs=[
                pl.BlockSpec((tb, 3, rows, 128), lambda g, prm: (g, 0, 0, 0)),
            ],
            out_specs=pl.BlockSpec((tb, 1), lambda g, prm: (g, 0),
                                   memory_space=pltpu.SMEM),
        ),
        compiler_params=pltpu.CompilerParams(
            dimension_semantics=("parallel",)),                        # v7x: 2 TCs
    )(params_flat, pc_t)
    return out[:B]


def _reference(trans, quat, pc):
    B = pc.shape[0]
    R = _quat_inv_rotmat(quat).reshape(B, 3, 3)
    pcr = jnp.einsum('bij,bnj->bni', R, pc) - trans[:, None, :]
    lo = jnp.array(LO, jnp.float32)
    hi = jnp.array(HI, jnp.float32)
    inside = jnp.all((pcr >= lo) & (pcr <= hi), axis=-1)
    norms = jnp.linalg.norm(pcr, axis=-1)
    cnt = inside.sum(-1).astype(jnp.float32)
    s = (norms * inside).sum(-1)
    dist = jnp.where(cnt > 0, -s / jnp.maximum(cnt, 1.0), 1.0)
    return (dist * DIST_COEFF)[:, None]


if __name__ == "__main__":
    key = jax.random.PRNGKey(0)
    k1, k2, k3 = jax.random.split(key, 3)
    B, N = 2, 64
    trans = jax.random.uniform(k1, (B, 3), minval=-0.02, maxval=0.02)
    quat = jax.random.normal(k2, (B, 4))
    pc = jax.random.uniform(k3, (B, N, 3), minval=-0.12, maxval=0.12)

    out = collision_distance_evaluator(trans, quat, pc)
    out = jax.block_until_ready(out)

    ref = _reference(trans, quat, pc)
    assert out.shape == (B, 1), out.shape
    assert jnp.allclose(out, ref, rtol=1e-4, atol=1.0), (out, ref)
    print("KERNEL_OK")
</pallas_src>

<mosaic_0001>
module attributes {stable_mosaic.version = 11 : i64} {
  func.func @_collision_kernel(%arg0: i32, %arg1: memref<32xf32, #tpu.memory_space<smem>>, %arg2: memref<2x3x8x128xf32, #tpu.memory_space<vmem>>, %arg3: memref<2x1xf32, #tpu.memory_space<smem>>) attributes {dimension_semantics = [#tpu.dimension_semantics<parallel>], iteration_bounds = array<i64: 1>, scalar_prefetch = 1 : i64, scratch_operands = 0 : i64, tpu.core_type = #tpu.core_type<tc>, window_params = [{transform_indices = @transform_0, window_bounds = array<i64: 2, 3, 8, 128>}, {transform_indices = @transform_1, window_bounds = array<i64: 2, 1>}]} {
    %c2_i32 = arith.constant 2 : i32
    %0 = arith.muli %arg0, %c2_i32 : i32
    %c0_i32 = arith.constant 0 : i32
    %1 = arith.addi %0, %c0_i32 : i32
    %c16_i32 = arith.constant 16 : i32
    %2 = arith.muli %1, %c16_i32 : i32
    %c0_i32_0 = arith.constant 0 : i32
    %3 = arith.addi %2, %c0_i32_0 : i32
    %4 = arith.index_cast %3 : i32 to index
    %5 = memref.load %arg1[%4] : memref<32xf32, #tpu.memory_space<smem>>
    %c1_i32 = arith.constant 1 : i32
    %6 = arith.addi %2, %c1_i32 : i32
    %7 = arith.index_cast %6 : i32 to index
    %8 = memref.load %arg1[%7] : memref<32xf32, #tpu.memory_space<smem>>
    %c2_i32_1 = arith.constant 2 : i32
    %9 = arith.addi %2, %c2_i32_1 : i32
    %10 = arith.index_cast %9 : i32 to index
    %11 = memref.load %arg1[%10] : memref<32xf32, #tpu.memory_space<smem>>
    %c3_i32 = arith.constant 3 : i32
    %12 = arith.addi %2, %c3_i32 : i32
    %13 = arith.index_cast %12 : i32 to index
    %14 = memref.load %arg1[%13] : memref<32xf32, #tpu.memory_space<smem>>
    %c4_i32 = arith.constant 4 : i32
    %15 = arith.addi %2, %c4_i32 : i32
    %16 = arith.index_cast %15 : i32 to index
    %17 = memref.load %arg1[%16] : memref<32xf32, #tpu.memory_space<smem>>
    %c5_i32 = arith.constant 5 : i32
    %18 = arith.addi %2, %c5_i32 : i32
    %19 = arith.index_cast %18 : i32 to index
    %20 = memref.load %arg1[%19] : memref<32xf32, #tpu.memory_space<smem>>
    %c6_i32 = arith.constant 6 : i32
    %21 = arith.addi %2, %c6_i32 : i32
    %22 = arith.index_cast %21 : i32 to index
    %23 = memref.load %arg1[%22] : memref<32xf32, #tpu.memory_space<smem>>
    %c7_i32 = arith.constant 7 : i32
    %24 = arith.addi %2, %c7_i32 : i32
    %25 = arith.index_cast %24 : i32 to index
    %26 = memref.load %arg1[%25] : memref<32xf32, #tpu.memory_space<smem>>
    %c8_i32 = arith.constant 8 : i32
    %27 = arith.addi %2, %c8_i32 : i32
    %28 = arith.index_cast %27 : i32 to index
    %29 = memref.load %arg1[%28] : memref<32xf32, #tpu.memory_space<smem>>
    %c9_i32 = arith.constant 9 : i32
    %30 = arith.addi %2, %c9_i32 : i32
    %31 = arith.index_cast %30 : i32 to index
    %32 = memref.load %arg1[%31] : memref<32xf32, #tpu.memory_space<smem>>
    %c10_i32 = arith.constant 10 : i32
    %33 = arith.addi %2, %c10_i32 : i32
    %34 = arith.index_cast %33 : i32 to index
    %35 = memref.load %arg1[%34] : memref<32xf32, #tpu.memory_space<smem>>
    %c11_i32 = arith.constant 11 : i32
    %36 = arith.addi %2, %c11_i32 : i32
    %37 = arith.index_cast %36 : i32 to index
    %38 = memref.load %arg1[%37] : memref<32xf32, #tpu.memory_space<smem>>
    %c0 = arith.constant 0 : index
    %c0_2 = arith.constant 0 : index
    %c0_3 = arith.constant 0 : index
    %c0_4 = arith.constant 0 : index
    %39 = vector.load %arg2[%c0, %c0_2, %c0_3, %c0_4] : memref<2x3x8x128xf32, #tpu.memory_space<vmem>>, vector<1x1x8x128xf32>
    %40 = vector.shape_cast %39 : vector<1x1x8x128xf32> to vector<8x128xf32>
    %c0_5 = arith.constant 0 : index
    %c1 = arith.constant 1 : index
    %c0_6 = arith.constant 0 : index
    %c0_7 = arith.constant 0 : index
    %41 = vector.load %arg2[%c0_5, %c1, %c0_6, %c0_7] : memref<2x3x8x128xf32, #tpu.memory_space<vmem>>, vector<1x1x8x128xf32>
    %42 = vector.shape_cast %41 : vector<1x1x8x128xf32> to vector<8x128xf32>
    %c0_8 = arith.constant 0 : index
    %c2 = arith.constant 2 : index
    %c0_9 = arith.constant 0 : index
    %c0_10 = arith.constant 0 : index
    %43 = vector.load %arg2[%c0_8, %c2, %c0_9, %c0_10] : memref<2x3x8x128xf32, #tpu.memory_space<vmem>>, vector<1x1x8x128xf32>
    %44 = vector.shape_cast %43 : vector<1x1x8x128xf32> to vector<8x128xf32>
    %45 = vector.broadcast %5 : f32 to vector<8x128xf32>
    %46 = arith.mulf %45, %40 : vector<8x128xf32>
    %47 = vector.broadcast %8 : f32 to vector<8x128xf32>
    %48 = arith.mulf %47, %42 : vector<8x128xf32>
    %49 = arith.addf %46, %48 : vector<8x128xf32>
    %50 = vector.broadcast %11 : f32 to vector<8x128xf32>
    %51 = arith.mulf %50, %44 : vector<8x128xf32>
    %52 = arith.addf %49, %51 : vector<8x128xf32>
    %53 = vector.broadcast %32 : f32 to vector<8x128xf32>
    %54 = arith.subf %52, %53 : vector<8x128xf32>
    %55 = vector.broadcast %14 : f32 to vector<8x128xf32>
    %56 = arith.mulf %55, %40 : vector<8x128xf32>
    %57 = vector.broadcast %17 : f32 to vector<8x128xf32>
    %58 = arith.mulf %57, %42 : vector<8x128xf32>
    %59 = arith.addf %56, %58 : vector<8x128xf32>
    %60 = vector.broadcast %20 : f32 to vector<8x128xf32>
    %61 = arith.mulf %60, %44 : vector<8x128xf32>
    %62 = arith.addf %59, %61 : vector<8x128xf32>
    %63 = vector.broadcast %35 : f32 to vector<8x128xf32>
    %64 = arith.subf %62, %63 : vector<8x128xf32>
    %65 = vector.broadcast %23 : f32 to vector<8x128xf32>
    %66 = arith.mulf %65, %40 : vector<8x128xf32>
    %67 = vector.broadcast %26 : f32 to vector<8x128xf32>
    %68 = arith.mulf %67, %42 : vector<8x128xf32>
    %69 = arith.addf %66, %68 : vector<8x128xf32>
    %70 = vector.broadcast %29 : f32 to vector<8x128xf32>
    %71 = arith.mulf %70, %44 : vector<8x128xf32>
    %72 = arith.addf %69, %71 : vector<8x128xf32>
    %73 = vector.broadcast %38 : f32 to vector<8x128xf32>
    %74 = arith.subf %72, %73 : vector<8x128xf32>
    %cst = arith.constant -1.049900e-01 : f32
    %75 = vector.broadcast %cst : f32 to vector<8x128xf32>
    %76 = arith.cmpf oge, %54, %75 : vector<8x128xf32>
    %cst_11 = arith.constant 1.014260e-01 : f32
    %77 = vector.broadcast %cst_11 : f32 to vector<8x128xf32>
    %78 = arith.cmpf ole, %54, %77 : vector<8x128xf32>
    %79 = arith.andi %76, %78 : vector<8x128xi1>
    %cst_12 = arith.constant -3.261580e-02 : f32
    %80 = vector.broadcast %cst_12 : f32 to vector<8x128xf32>
    %81 = arith.cmpf oge, %64, %80 : vector<8x128xf32>
    %82 = arith.andi %79, %81 : vector<8x128xi1>
    %cst_13 = arith.constant 3.263590e-02 : f32
    %83 = vector.broadcast %cst_13 : f32 to vector<8x128xf32>
    %84 = arith.cmpf ole, %64, %83 : vector<8x128xf32>
    %85 = arith.andi %82, %84 : vector<8x128xi1>
    %cst_14 = arith.constant -2.692480e-02 : f32
    %86 = vector.broadcast %cst_14 : f32 to vector<8x128xf32>
    %87 = arith.cmpf oge, %74, %86 : vector<8x128xf32>
    %88 = arith.andi %85, %87 : vector<8x128xi1>
    %cst_15 = arith.constant 1.132490e-01 : f32
    %89 = vector.broadcast %cst_15 : f32 to vector<8x128xf32>
    %90 = arith.cmpf ole, %74, %89 : vector<8x128xf32>
    %91 = arith.andi %88, %90 : vector<8x128xi1>
    %92 = arith.mulf %54, %54 : vector<8x128xf32>
    %93 = arith.mulf %64, %64 : vector<8x128xf32>
    %94 = arith.addf %92, %93 : vector<8x128xf32>
    %95 = arith.mulf %74, %74 : vector<8x128xf32>
    %96 = arith.addf %94, %95 : vector<8x128xf32>
    %97 = math.sqrt %96 : vector<8x128xf32>
    %cst_16 = arith.constant 0.000000e+00 : f32
    %98 = vector.broadcast %cst_16 : f32 to vector<8x128xf32>
    %99 = arith.select %91, %97, %98 : vector<8x128xi1>, vector<8x128xf32>
    %100 = vector.shape_cast %99 : vector<8x128xf32> to vector<1x8x128xf32>
    %cst_17 = arith.constant dense<0.000000e+00> : vector<1xf32>
    %101 = vector.multi_reduction <add>, %100, %cst_17 [1, 2] : vector<1x8x128xf32> to vector<1xf32>
    %102 = vector.shape_cast %101 : vector<1xf32> to vector<1x1x1xf32>
    %103 = vector.extract %102[0, 0, 0] : f32 from vector<1x1x1xf32>
    %104 = arith.extui %91 : vector<8x128xi1> to vector<8x128xi32>
    %105 = arith.sitofp %104 : vector<8x128xi32> to vector<8x128xf32>
    %106 = vector.shape_cast %105 : vector<8x128xf32> to vector<1x8x128xf32>
    %cst_18 = arith.constant dense<0.000000e+00> : vector<1xf32>
    %107 = vector.multi_reduction <add>, %106, %cst_18 [1, 2] : vector<1x8x128xf32> to vector<1xf32>
    %108 = vector.shape_cast %107 : vector<1xf32> to vector<1x1x1xf32>
    %109 = vector.extract %108[0, 0, 0] : f32 from vector<1x1x1xf32>
    %cst_19 = arith.constant 0.000000e+00 : f32
    %110 = arith.cmpf ogt, %109, %cst_19 : f32
    %cst_20 = arith.constant 0.000000e+00 : f32
    %111 = arith.subf %cst_20, %103 : f32
    %cst_21 = arith.constant 1.000000e+00 : f32
    %112 = arith.maximumf %109, %cst_21 : f32
    %113 = arith.divf %111, %112 : f32
    %cst_22 = arith.constant 1.000000e+00 : f32
    %114 = arith.select %110, %113, %cst_22 : f32
    %cst_23 = arith.constant 1.000000e+04 : f32
    %115 = arith.mulf %114, %cst_23 : f32
    %c0_24 = arith.constant 0 : index
    %c0_25 = arith.constant 0 : index
    %116 = memref.load %arg3[%c0_24, %c0_25] : memref<2x1xf32, #tpu.memory_space<smem>>
    memref.store %115, %arg3[%c0_24, %c0_25] : memref<2x1xf32, #tpu.memory_space<smem>>
    %c2_i32_26 = arith.constant 2 : i32
    %117 = arith.muli %arg0, %c2_i32_26 : i32
    %c1_i32_27 = arith.constant 1 : i32
    %118 = arith.addi %117, %c1_i32_27 : i32
    %c16_i32_28 = arith.constant 16 : i32
    %119 = arith.muli %118, %c16_i32_28 : i32
    %c0_i32_29 = arith.constant 0 : i32
    %120 = arith.addi %119, %c0_i32_29 : i32
    %121 = arith.index_cast %120 : i32 to index
    %122 = memref.load %arg1[%121] : memref<32xf32, #tpu.memory_space<smem>>
    %c1_i32_30 = arith.constant 1 : i32
    %123 = arith.addi %119, %c1_i32_30 : i32
    %124 = arith.index_cast %123 : i32 to index
    %125 = memref.load %arg1[%124] : memref<32xf32, #tpu.memory_space<smem>>
    %c2_i32_31 = arith.constant 2 : i32
    %126 = arith.addi %119, %c2_i32_31 : i32
    %127 = arith.index_cast %126 : i32 to index
    %128 = memref.load %arg1[%127] : memref<32xf32, #tpu.memory_space<smem>>
    %c3_i32_32 = arith.constant 3 : i32
    %129 = arith.addi %119, %c3_i32_32 : i32
    %130 = arith.index_cast %129 : i32 to index
    %131 = memref.load %arg1[%130] : memref<32xf32, #tpu.memory_space<smem>>
    %c4_i32_33 = arith.constant 4 : i32
    %132 = arith.addi %119, %c4_i32_33 : i32
    %133 = arith.index_cast %132 : i32 to index
    %134 = memref.load %arg1[%133] : memref<32xf32, #tpu.memory_space<smem>>
    %c5_i32_34 = arith.constant 5 : i32
    %135 = arith.addi %119, %c5_i32_34 : i32
    %136 = arith.index_cast %135 : i32 to index
    %137 = memref.load %arg1[%136] : memref<32xf32, #tpu.memory_space<smem>>
    %c6_i32_35 = arith.constant 6 : i32
    %138 = arith.addi %119, %c6_i32_35 : i32
    %139 = arith.index_cast %138 : i32 to index
    %140 = memref.load %arg1[%139] : memref<32xf32, #tpu.memory_space<smem>>
    %c7_i32_36 = arith.constant 7 : i32
    %141 = arith.addi %119, %c7_i32_36 : i32
    %142 = arith.index_cast %141 : i32 to index
    %143 = memref.load %arg1[%142] : memref<32xf32, #tpu.memory_space<smem>>
    %c8_i32_37 = arith.constant 8 : i32
    %144 = arith.addi %119, %c8_i32_37 : i32
    %145 = arith.index_cast %144 : i32 to index
    %146 = memref.load %arg1[%145] : memref<32xf32, #tpu.memory_space<smem>>
    %c9_i32_38 = arith.constant 9 : i32
    %147 = arith.addi %119, %c9_i32_38 : i32
    %148 = arith.index_cast %147 : i32 to index
    %149 = memref.load %arg1[%148] : memref<32xf32, #tpu.memory_space<smem>>
    %c10_i32_39 = arith.constant 10 : i32
    %150 = arith.addi %119, %c10_i32_39 : i32
    %151 = arith.index_cast %150 : i32 to index
    %152 = memref.load %arg1[%151] : memref<32xf32, #tpu.memory_space<smem>>
    %c11_i32_40 = arith.constant 11 : i32
    %153 = arith.addi %119, %c11_i32_40 : i32
    %154 = arith.index_cast %153 : i32 to index
    %155 = memref.load %arg1[%154] : memref<32xf32, #tpu.memory_space<smem>>
    %c1_41 = arith.constant 1 : index
    %c0_42 = arith.constant 0 : index
    %c0_43 = arith.constant 0 : index
    %c0_44 = arith.constant 0 : index
    %156 = vector.load %arg2[%c1_41, %c0_42, %c0_43, %c0_44] : memref<2x3x8x128xf32, #tpu.memory_space<vmem>>, vector<1x1x8x128xf32>
    %157 = vector.shape_cast %156 : vector<1x1x8x128xf32> to vector<8x128xf32>
    %c1_45 = arith.constant 1 : index
    %c1_46 = arith.constant 1 : index
    %c0_47 = arith.constant 0 : index
    %c0_48 = arith.constant 0 : index
    %158 = vector.load %arg2[%c1_45, %c1_46, %c0_47, %c0_48] : memref<2x3x8x128xf32, #tpu.memory_space<vmem>>, vector<1x1x8x128xf32>
    %159 = vector.shape_cast %158 : vector<1x1x8x128xf32> to vector<8x128xf32>
    %c1_49 = arith.constant 1 : index
    %c2_50 = arith.constant 2 : index
    %c0_51 = arith.constant 0 : index
    %c0_52 = arith.constant 0 : index
    %160 = vector.load %arg2[%c1_49, %c2_50, %c0_51, %c0_52] : memref<2x3x8x128xf32, #tpu.memory_space<vmem>>, vector<1x1x8x128xf32>
    %161 = vector.shape_cast %160 : vector<1x1x8x128xf32> to vector<8x128xf32>
    %162 = vector.broadcast %122 : f32 to vector<8x128xf32>
    %163 = arith.mulf %162, %157 : vector<8x128xf32>
    %164 = vector.broadcast %125 : f32 to vector<8x128xf32>
    %165 = arith.mulf %164, %159 : vector<8x128xf32>
    %166 = arith.addf %163, %165 : vector<8x128xf32>
    %167 = vector.broadcast %128 : f32 to vector<8x128xf32>
    %168 = arith.mulf %167, %161 : vector<8x128xf32>
    %169 = arith.addf %166, %168 : vector<8x128xf32>
    %170 = vector.broadcast %149 : f32 to vector<8x128xf32>
    %171 = arith.subf %169, %170 : vector<8x128xf32>
    %172 = vector.broadcast %131 : f32 to vector<8x128xf32>
    %173 = arith.mulf %172, %157 : vector<8x128xf32>
    %174 = vector.broadcast %134 : f32 to vector<8x128xf32>
    %175 = arith.mulf %174, %159 : vector<8x128xf32>
    %176 = arith.addf %173, %175 : vector<8x128xf32>
    %177 = vector.broadcast %137 : f32 to vector<8x128xf32>
    %178 = arith.mulf %177, %161 : vector<8x128xf32>
    %179 = arith.addf %176, %178 : vector<8x128xf32>
    %180 = vector.broadcast %152 : f32 to vector<8x128xf32>
    %181 = arith.subf %179, %180 : vector<8x128xf32>
    %182 = vector.broadcast %140 : f32 to vector<8x128xf32>
    %183 = arith.mulf %182, %157 : vector<8x128xf32>
    %184 = vector.broadcast %143 : f32 to vector<8x128xf32>
    %185 = arith.mulf %184, %159 : vector<8x128xf32>
    %186 = arith.addf %183, %185 : vector<8x128xf32>
    %187 = vector.broadcast %146 : f32 to vector<8x128xf32>
    %188 = arith.mulf %187, %161 : vector<8x128xf32>
    %189 = arith.addf %186, %188 : vector<8x128xf32>
    %190 = vector.broadcast %155 : f32 to vector<8x128xf32>
    %191 = arith.subf %189, %190 : vector<8x128xf32>
    %cst_53 = arith.constant -1.049900e-01 : f32
    %192 = vector.broadcast %cst_53 : f32 to vector<8x128xf32>
    %193 = arith.cmpf oge, %171, %192 : vector<8x128xf32>
    %cst_54 = arith.constant 1.014260e-01 : f32
    %194 = vector.broadcast %cst_54 : f32 to vector<8x128xf32>
    %195 = arith.cmpf ole, %171, %194 : vector<8x128xf32>
    %196 = arith.andi %193, %195 : vector<8x128xi1>
    %cst_55 = arith.constant -3.261580e-02 : f32
    %197 = vector.broadcast %cst_55 : f32 to vector<8x128xf32>
    %198 = arith.cmpf oge, %181, %197 : vector<8x128xf32>
    %199 = arith.andi %196, %198 : vector<8x128xi1>
    %cst_56 = arith.constant 3.263590e-02 : f32
    %200 = vector.broadcast %cst_56 : f32 to vector<8x128xf32>
    %201 = arith.cmpf ole, %181, %200 : vector<8x128xf32>
    %202 = arith.andi %199, %201 : vector<8x128xi1>
    %cst_57 = arith.constant -2.692480e-02 : f32
    %203 = vector.broadcast %cst_57 : f32 to vector<8x128xf32>
    %204 = arith.cmpf oge, %191, %203 : vector<8x128xf32>
    %205 = arith.andi %202, %204 : vector<8x128xi1>
    %cst_58 = arith.constant 1.132490e-01 : f32
    %206 = vector.broadcast %cst_58 : f32 to vector<8x128xf32>
    %207 = arith.cmpf ole, %191, %206 : vector<8x128xf32>
    %208 = arith.andi %205, %207 : vector<8x128xi1>
    %209 = arith.mulf %171, %171 : vector<8x128xf32>
    %210 = arith.mulf %181, %181 : vector<8x128xf32>
    %211 = arith.addf %209, %210 : vector<8x128xf32>
    %212 = arith.mulf %191, %191 : vector<8x128xf32>
    %213 = arith.addf %211, %212 : vector<8x128xf32>
    %214 = math.sqrt %213 : vector<8x128xf32>
    %cst_59 = arith.constant 0.000000e+00 : f32
    %215 = vector.broadcast %cst_59 : f32 to vector<8x128xf32>
    %216 = arith.select %208, %214, %215 : vector<8x128xi1>, vector<8x128xf32>
    %217 = vector.shape_cast %216 : vector<8x128xf32> to vector<1x8x128xf32>
    %cst_60 = arith.constant dense<0.000000e+00> : vector<1xf32>
    %218 = vector.multi_reduction <add>, %217, %cst_60 [1, 2] : vector<1x8x128xf32> to vector<1xf32>
    %219 = vector.shape_cast %218 : vector<1xf32> to vector<1x1x1xf32>
    %220 = vector.extract %219[0, 0, 0] : f32 from vector<1x1x1xf32>
    %221 = arith.extui %208 : vector<8x128xi1> to vector<8x128xi32>
    %222 = arith.sitofp %221 : vector<8x128xi32> to vector<8x128xf32>
    %223 = vector.shape_cast %222 : vector<8x128xf32> to vector<1x8x128xf32>
    %cst_61 = arith.constant dense<0.000000e+00> : vector<1xf32>
    %224 = vector.multi_reduction <add>, %223, %cst_61 [1, 2] : vector<1x8x128xf32> to vector<1xf32>
    %225 = vector.shape_cast %224 : vector<1xf32> to vector<1x1x1xf32>
    %226 = vector.extract %225[0, 0, 0] : f32 from vector<1x1x1xf32>
    %cst_62 = arith.constant 0.000000e+00 : f32
    %227 = arith.cmpf ogt, %226, %cst_62 : f32
    %cst_63 = arith.constant 0.000000e+00 : f32
    %228 = arith.subf %cst_63, %220 : f32
    %cst_64 = arith.constant 1.000000e+00 : f32
    %229 = arith.maximumf %226, %cst_64 : f32
    %230 = arith.divf %228, %229 : f32
    %cst_65 = arith.constant 1.000000e+00 : f32
    %231 = arith.select %227, %230, %cst_65 : f32
    %cst_66 = arith.constant 1.000000e+04 : f32
    %232 = arith.mulf %231, %cst_66 : f32
    %c1_67 = arith.constant 1 : index
    %c0_68 = arith.constant 0 : index
    %233 = memref.load %arg3[%c1_67, %c0_68] : memref<2x1xf32, #tpu.memory_space<smem>>
    memref.store %232, %arg3[%c1_67, %c0_68] : memref<2x1xf32, #tpu.memory_space<smem>>
    return
  }
  func.func @transform_0(%arg0: i32, %arg1: memref<32xf32, #tpu.memory_space<smem>>) -> (i32, i32, i32, i32) {
    %c0_i32 = arith.constant 0 : i32
    %c0_i32_0 = arith.constant 0 : i32
    %c0_i32_1 = arith.constant 0 : i32
    %c0_i32_2 = arith.constant 0 : i32
    return %arg0, %c0_i32, %c0_i32_0, %c0_i32_1 : i32, i32, i32, i32
  }
  func.func @transform_1(%arg0: i32, %arg1: memref<32xf32, #tpu.memory_space<smem>>) -> (i32, i32) {
    %c0_i32 = arith.constant 0 : i32
    %c0_i32_0 = arith.constant 0 : i32
    return %arg0, %c0_i32 : i32, i32
  }
}

</mosaic_0001>

<llo_original>
// kernel: collision_distance_evaluator.1
$region0: #{collision_distance_evaluator.1}
  #allocation0 [shape = 'u32[]', space=smem, size = 0x4, offset = 0x4, fixed_abs, tag = 'smem constant byte address 0x4 - core index']
  #allocation1 [shape = 'u32[144,128]{1,0:T(1,128)}', space=vmem, size = 0x12000, scoped, tag = 'internal scratch']
  #allocation2 [shape = 's32[1]{0}', space=sflag, size = 0x4, scoped, tag = 'scoped memory for collision_distance_evaluator.1']
  #allocation3 [shape = 'u8[512]{0}', space=smem, size = 0x200, scoped, tag = 'prefetched SMEM operand 0']
  %s0 = inlined_call_operand.vmem [shape: f32[32], index: 0, kind: input, shape index: {}]
  %s1 = inlined_call_operand.vmem [shape: f32[2,3,8,128], index: 1, kind: input, shape index: {}]
  %s2 = inlined_call_operand.vmem [shape: f32[2,1], index: 2, kind: output, shape index: {}]
  %s3 = sld [smem:[#allocation0]]
  $region14: #{collision_distance_evaluator.1} parent=0
    _
  %s5 = ssub.s32 1, %s3
  %s6 = scalar_select 0, %s5, %s3
  %s7 = sshll.u32 %s0, 4
  %s8 = int_to_ptr.vmem [resolvable:$true] %s7
  %10 = dma.vmem_to_smem %s8, 16, [#allocation3], [#allocation2]
  %11 = dma.done [#allocation2], 16
  %12 = sfence
  $region1: #{collision_distance_evaluator.1} parent=0
    #allocation4 [shape = 'u8[1024]{0}', space=smem, size = 0x400, scoped, tag = 'output window, operand 0, single buffered']
    #allocation5 [shape = 's32[1]{0}', space=sflag, size = 0x4, scoped, tag = 'scoped memory for collision_distance_evaluator.1']
    %13 = vsyncpa [#allocation5], 0
    // Predicated region
    $region2: #{collision_distance_evaluator.1} parent=1 // pred_check
      _
    $region3: #{collision_distance_evaluator.1} parent=1 // pred_check_branch
      %15 = sbr.rel (0) target = $region5
    $region4: #{collision_distance_evaluator.1} parent=1 // pred_region
      _
    $region5: #{collision_distance_evaluator.1} parent=1 // pred_fallthru
      _
    %s16 = smul.u32 0, 32
    %s17 = sld [smem:[#allocation3 + %s16]]
    %s18 = sadd.s32 %s16, 1
    %s19 = sld [smem:[#allocation3 + %s18]]
    %s20 = sadd.s32 %s16, 2
    %s21 = sld [smem:[#allocation3 + %s20]]
    %s22 = sadd.s32 %s16, 3
    %s23 = sld [smem:[#allocation3 + %s22]]
    %s24 = sadd.s32 %s16, 4
    %s25 = sld [smem:[#allocation3 + %s24]]
    %s26 = sadd.s32 %s16, 5
    %s27 = sld [smem:[#allocation3 + %s26]]
    %s28 = sadd.s32 %s16, 6
    %s29 = sld [smem:[#allocation3 + %s28]]
    %s30 = sadd.s32 %s16, 7
    %s31 = sld [smem:[#allocation3 + %s30]]
    %s32 = sadd.s32 %s16, 8
    %s33 = sld [smem:[#allocation3 + %s32]]
    %s34 = sadd.s32 %s16, 9
    %s35 = sld [smem:[#allocation3 + %s34]]
    %s36 = sadd.s32 %s16, 10
    %s37 = sld [smem:[#allocation3 + %s36]]
    %s38 = sadd.s32 %s16, 11
    %s39 = sld [smem:[#allocation3 + %s38]]
    %v40 = vld [vmem:[%s1] sm:$0xff]
    %s41 = scalar_lea.vmem %s1, 8
    %v42 = vld [vmem:[%s41] sm:$0xff]
    %s43 = scalar_lea.vmem %s1, 16
    %v44 = vld [vmem:[%s43] sm:$0xff]
    %v45 = vstv %s17
    %v46 = vmul.f32 %v45, %v40
    %v47 = vstv %s19
    %v48 = vmul.f32 %v47, %v42
    %v49 = vadd.f32 %v46, %v48
    %v50 = vstv %s21
    %v51 = vmul.f32 %v50, %v44
    %v52 = vadd.f32 %v49, %v51
    %v53 = vstv %s35
    %v54 = vsub.f32 %v52, %v53
    %v55 = vstv %s23
    %v56 = vmul.f32 %v55, %v40
    %v57 = vstv %s25
    %v58 = vmul.f32 %v57, %v42
    %v59 = vadd.f32 %v56, %v58
    %v60 = vstv %s27
    %v61 = vmul.f32 %v60, %v44
    %v62 = vadd.f32 %v59, %v61
    %v63 = vstv %s37
    %v64 = vsub.f32 %v62, %v63
    %v65 = vstv %s29
    %v66 = vmul.f32 %v65, %v40
    %v67 = vstv %s31
    %v68 = vmul.f32 %v67, %v42
    %v69 = vadd.f32 %v66, %v68
    %v70 = vstv %s33
    %v71 = vmul.f32 %v70, %v44
    %v72 = vadd.f32 %v69, %v71
    %v73 = vstv %s39
    %v74 = vsub.f32 %v72, %v73
    %vm75 = vcmp.ge.f32.partialorder %v54, -0.10499
    %vm76 = vcmp.le.f32.partialorder %v54, 0.101426
    %vm77 = vmand %vm75, %vm76
    %vm78 = vcmp.ge.f32.partialorder %v64, -0.0326158
    %vm79 = vmand %vm77, %vm78
    %vm80 = vcmp.le.f32.partialorder %v64, 0.0326359
    %vm81 = vmand %vm79, %vm80
    %vm82 = vcmp.ge.f32.partialorder %v74, -0.0269248
    %vm83 = vmand %vm81, %vm82
    %vm84 = vcmp.le.f32.partialorder %v74, 0.113249
    %vm85 = vmand %vm83, %vm84
    %v86 = vmul.f32 %v54, %v54
    %v87 = vmul.f32 %v64, %v64
    %v88 = vadd.f32 %v86, %v87
    %v89 = vmul.f32 %v74, %v74
    %v90 = vadd.f32 %v88, %v89
    %v91 = vrsqrt.pop %v90
    %v92 = vmul.f32 %v90, %v91
    %vm93 = vcmp.eq.f32.partialorder %v90, inf
    %v94 = vsel %vm93, %v90, %v92
    %vm95 = vcmp.eq.f32.partialorder %v90, 0.0
    %v96 = vand.u32 %v90, 2147483648
    %v97 = vsel %vm95, %v96, %v94
    %v98 = vsel %vm85, %v97, 0.0
    %99 = vadd.xlane.f32.xlu0 %v98
    %v100 = vpop.xlane.xlu0 %99
    %v101 = vrot.slane %v100, 4
    %v102 = vadd.f32 %v100, %v101
    %v103 = vrot.slane %v102, 2
    %v104 = vadd.f32 %v102, %v103
    %v105 = vrot.slane %v104, 1
    %v106 = vadd.f32 %v104, %v105
    %s107 = vtos %v106
    %v108 = vsel %vm85, 1, 0
    %v109 = vcvt.s32.f32 %v108
    %110 = vadd.xlane.f32.xlu0 %v109
    %v111 = vpop.xlane.xlu0 %110
    %v112 = vrot.slane %v111, 4
    %v113 = vadd.f32 %v111, %v112
    %v114 = vrot.slane %v113, 2
    %v115 = vadd.f32 %v113, %v114
    %v116 = vrot.slane %v115, 1
    %v117 = vadd.f32 %v115, %v116
    %s118 = vtos %v117
    %p119 = scmp.gt.f32.partialorder %s118, 0.0
    %s120 = ssub.f32 0.0, %s107
    %s121 = smax.f32 %s118, 1.0
    %v122 = vstv %s121
    %v123 = vrcp.pop %v122
    %s124 = vtos %v123
    %s125 = smul.f32 %s120, %s124
    %s126 = scalar_select %p119, %s125, 1.0
    %s127 = smul.f32 %s126, 10000.0
    %s128 = scalar_lea.smem [#allocation4], 0
    %129 = sst [smem:[%s128]] %s127
    %s130 = smul.u32 0, 2
    %s131 = sadd.s32 %s130, 1
    %s132 = smul.u32 %s131, 16
    %s133 = sld [smem:[#allocation3 + %s132]]
    %s134 = sadd.s32 %s132, 1
    %s135 = sld [smem:[#allocation3 + %s134]]
    %s136 = sadd.s32 %s132, 2
    %s137 = sld [smem:[#allocation3 + %s136]]
    %s138 = sadd.s32 %s132, 3
    %s139 = sld [smem:[#allocation3 + %s138]]
    %s140 = sadd.s32 %s132, 4
    %s141 = sld [smem:[#allocation3 + %s140]]
    %s142 = sadd.s32 %s132, 5
    %s143 = sld [smem:[#allocation3 + %s142]]
    %s144 = sadd.s32 %s132, 6
    %s145 = sld [smem:[#allocation3 + %s144]]
    %s146 = sadd.s32 %s132, 7
    %s147 = sld [smem:[#allocation3 + %s146]]
    %s148 = sadd.s32 %s132, 8
    %s149 = sld [smem:[#allocation3 + %s148]]
    %s150 = sadd.s32 %s132, 9
    %s151 = sld [smem:[#allocation3 + %s150]]
    %s152 = sadd.s32 %s132, 10
    %s153 = sld [smem:[#allocation3 + %s152]]
    %s154 = sadd.s32 %s132, 11
    %s155 = sld [smem:[#allocation3 + %s154]]
    %s156 = scalar_lea.vmem %s1, 24
    %v157 = vld [vmem:[%s156] sm:$0xff]
    %s158 = scalar_lea.vmem %s1, 32
    %v159 = vld [vmem:[%s158] sm:$0xff]
    %s160 = scalar_lea.vmem %s1, 40
    %v161 = vld [vmem:[%s160] sm:$0xff]
    %v162 = vstv %s133
    %v163 = vmul.f32 %v162, %v157
    %v164 = vstv %s135
    %v165 = vmul.f32 %v164, %v159
    %v166 = vadd.f32 %v163, %v165
    %v167 = vstv %s137
    %v168 = vmul.f32 %v167, %v161
    %v169 = vadd.f32 %v166, %v168
    %v170 = vstv %s151
    %v171 = vsub.f32 %v169, %v170
    %v172 = vstv %s139
    %v173 = vmul.f32 %v172, %v157
    %v174 = vstv %s141
    %v175 = vmul.f32 %v174, %v159
    %v176 = vadd.f32 %v173, %v175
    %v177 = vstv %s143
    %v178 = vmul.f32 %v177, %v161
    %v179 = vadd.f32 %v176, %v178
    %v180 = vstv %s153
    %v181 = vsub.f32 %v179, %v180
    %v182 = vstv %s145
    %v183 = vmul.f32 %v182, %v157
    %v184 = vstv %s147
    %v185 = vmul.f32 %v184, %v159
    %v186 = vadd.f32 %v183, %v185
    %v187 = vstv %s149
    %v188 = vmul.f32 %v187, %v161
    %v189 = vadd.f32 %v186, %v188
    %v190 = vstv %s155
    %v191 = vsub.f32 %v189, %v190
    %vm192 = vcmp.ge.f32.partialorder %v171, -0.10499
    %vm193 = vcmp.le.f32.partialorder %v171, 0.101426
    %vm194 = vmand %vm192, %vm193
    %vm195 = vcmp.ge.f32.partialorder %v181, -0.0326158
    %vm196 = vmand %vm194, %vm195
    %vm197 = vcmp.le.f32.partialorder %v181, 0.0326359
    %vm198 = vmand %vm196, %vm197
    %vm199 = vcmp.ge.f32.partialorder %v191, -0.0269248
    %vm200 = vmand %vm198, %vm199
    %vm201 = vcmp.le.f32.partialorder %v191, 0.113249
    %vm202 = vmand %vm200, %vm201
    %v203 = vmul.f32 %v171, %v171
    %v204 = vmul.f32 %v181, %v181
    %v205 = vadd.f32 %v203, %v204
    %v206 = vmul.f32 %v191, %v191
    %v207 = vadd.f32 %v205, %v206
    %v208 = vrsqrt.pop %v207
    %v209 = vmul.f32 %v207, %v208
    %vm210 = vcmp.eq.f32.partialorder %v207, inf
    %v211 = vsel %vm210, %v207, %v209
    %vm212 = vcmp.eq.f32.partialorder %v207, 0.0
    %v213 = vand.u32 %v207, 2147483648
    %v214 = vsel %vm212, %v213, %v211
    %v215 = vsel %vm202, %v214, 0.0
    %216 = vadd.xlane.f32.xlu0 %v215
    %v217 = vpop.xlane.xlu0 %216
    %v218 = vrot.slane %v217, 4
    %v219 = vadd.f32 %v217, %v218
    %v220 = vrot.slane %v219, 2
    %v221 = vadd.f32 %v219, %v220
    %v222 = vrot.slane %v221, 1
    %v223 = vadd.f32 %v221, %v222
    %s224 = vtos %v223
    %v225 = vsel %vm202, 1, 0
    %v226 = vcvt.s32.f32 %v225
    %227 = vadd.xlane.f32.xlu0 %v226
    %v228 = vpop.xlane.xlu0 %227
    %v229 = vrot.slane %v228, 4
    %v230 = vadd.f32 %v228, %v229
    %v231 = vrot.slane %v230, 2
    %v232 = vadd.f32 %v230, %v231
    %v233 = vrot.slane %v232, 1
    %v234 = vadd.f32 %v232, %v233
    %s235 = vtos %v234
    %p236 = scmp.gt.f32.partialorder %s235, 0.0
    %s237 = ssub.f32 0.0, %s224
    %s238 = smax.f32 %s235, 1.0
    %v239 = vstv %s238
    %v240 = vrcp.pop %v239
    %s241 = vtos %v240
    %s242 = smul.f32 %s237, %s241
    %s243 = scalar_select %p236, %s242, 1.0
    %s244 = smul.f32 %s243, 10000.0
    %s245 = scalar_lea.smem [#allocation4], 128
    %246 = sst [smem:[%s245]] %s244
    // Predicated region
    $region6: #{collision_distance_evaluator.1} parent=1 // pred_check
      _
    $region7: #{collision_distance_evaluator.1} parent=1 // pred_check_branch
      %248 = sbr.rel (0) target = $region9
    $region8: #{collision_distance_evaluator.1} parent=1 // pred_region
      %s250 = ssub.s32 32, 32
      %251 = vsyncadd [#allocation5], %s250
      %s253 = sshll.u32 %s2, 4
      %s254 = int_to_ptr.vmem [resolvable:$true] %s253
      %256 = dma.smem_to_vmem [#allocation4], 32, %s254, [#allocation5]
    $region9: #{collision_distance_evaluator.1} parent=1 // pred_fallthru
      _
    // Predicated region
    $region10: #{collision_distance_evaluator.1} parent=1 // pred_check
      _
    $region11: #{collision_distance_evaluator.1} parent=1 // pred_check_branch
      %258 = sbr.rel (0) target = $region13
    $region12: #{collision_distance_evaluator.1} parent=1 // pred_region
      %259 = dma.done [#allocation5], 32
    $region13: #{collision_distance_evaluator.1} parent=1 // pred_fallthru
      _
    %260 = sfence
    %261 = vsyncpa [#allocation5], 1

</llo_original>
